<compile_context>
chip_gen: v7x
topology: tpu7x:2x2x1
jax: 0.10.0
libtpu: 0.0.40
codegen_flags: <defaults>
</compile_context>

<pallas_src>
import functools

import jax
import jax.numpy as jnp
import numpy as np
from jax import lax
from jax.experimental import pallas as pl
from jax.experimental.pallas import tpu as pltpu


def _round_up(x, m):
    return ((x + m - 1) // m) * m


def shared_moe_kernel(
    x_ref, w1s_ref, b1s_ref, w2s_ref, b2s_ref,
    wg_ref, bg_ref, w1cat_ref, b1cat_ref, w2cat_ref, b2pad_ref, expand_ref,
    gamma_ref, beta_ref,
    y_ref, stats_ref,
    *, n_tokens, w_shared, w_routed, ln_eps, mxu_dtype,
):
    TN = x_ref.shape[0]
    GP = wg_ref.shape[1]           # padded gate width (multiple of 128)

    x_f32 = x_ref[...].astype(jnp.float32)     # residual / LayerNorm path in f32
    xm = x_ref[...].astype(mxu_dtype)          # MXU operand dtype

    # ---- shared expert: Linear -> ReLU -> Linear ----
    h = jnp.dot(xm, w1s_ref[...], preferred_element_type=jnp.float32) + b1s_ref[...]
    h = jnp.maximum(h, 0.0)
    x1 = jnp.dot(h.astype(mxu_dtype), w2s_ref[...],
                 preferred_element_type=jnp.float32) + b2s_ref[...]

    # ---- gate: softmax over padded expert lanes (pad columns biased to -1e30) ----
    logits = jnp.dot(xm, wg_ref[...], preferred_element_type=jnp.float32) + bg_ref[...]
    mx = jnp.max(logits, axis=-1, keepdims=True)
    ex = jnp.exp(logits - mx)
    denom = jnp.sum(ex, axis=-1, keepdims=True)
    probs = ex * pl.reciprocal(denom, approx=True)           # (TN, GP), f32

    # ---- routed experts fused into two large MXU matmuls ----
    h_all = jnp.dot(xm, w1cat_ref[...], preferred_element_type=jnp.float32) + b1cat_ref[...]
    h_all = jnp.maximum(h_all, 0.0)                          # (TN, E*H)
    pm = probs.astype(mxu_dtype)
    # expand maps the E gate columns onto the E*H hidden columns (block-diagonal ones)
    scale = jnp.dot(pm, expand_ref[...], preferred_element_type=jnp.float32)   # (TN, E*H)
    h_sc = (h_all * scale).astype(mxu_dtype)
    x2 = jnp.dot(h_sc, w2cat_ref[...], preferred_element_type=jnp.float32)
    x2 = x2 + jnp.dot(pm, b2pad_ref[...], preferred_element_type=jnp.float32)  # + sum_e p_e b2_e

    # ---- combine experts, dropout(identity), residual, LayerNorm ----
    y = w_shared * x1 + w_routed * x2 + x_f32
    mu = jnp.mean(y, axis=-1, keepdims=True)
    var = jnp.mean((y - mu) ** 2, axis=-1, keepdims=True)
    yn = (y - mu) * lax.rsqrt(var + ln_eps)
    y_ref[...] = (yn * gamma_ref[...] + beta_ref[...]).astype(y_ref.dtype)

    # ---- per-tile load-balance stats (lane-dense, written once per tile) ----
    row = pl.program_id(0) * TN + lax.broadcasted_iota(jnp.int32, (TN, 1), 0)
    valid = row < n_tokens                                   # mask out padded tokens
    col = lax.broadcasted_iota(jnp.int32, (TN, GP), 1)
    is_max = logits >= mx
    first = jnp.min(jnp.where(is_max, col, GP), axis=-1, keepdims=True)  # first-index tie-break
    onehot = (col == first).astype(jnp.float32)
    probs_m = jnp.where(valid, probs, 0.0)
    onehot_m = jnp.where(valid, onehot, 0.0)
    stats_ref[0:1, :] = jnp.sum(probs_m, axis=0, keepdims=True)
    stats_ref[1:2, :] = jnp.sum(onehot_m, axis=0, keepdims=True)


def shared_moe_fnn(x, params, *, num_experts, expert_weights, ln_eps=1e-5,
                   tile_n=256, mxu_dtype=jnp.float32):
    B, S, D = x.shape
    N = B * S
    E = num_experts
    H = params["w1e"].shape[-1]
    EH = E * H
    GP = max(128, _round_up(E, 128))     # lane-padded gate width

    # Token tile: large (MXU-friendly) by default, clamped for tiny inputs.
    tile_n = max(8, min(tile_n, _round_up(N, 8)))
    N_pad = _round_up(N, tile_n)
    num_tiles = N_pad // tile_n

    xf = x.reshape(N, D)
    if N_pad != N:
        xf = jnp.pad(xf, ((0, N_pad - N), (0, 0)))

    f32 = jnp.float32
    md = mxu_dtype
    p = params

    # ---- host-side parameter packing (fused / lane-padded) ----
    w1s = p["w1s"].astype(md)
    b1s = p["b1s"].astype(f32)
    w2s = p["w2s"].astype(md)
    b2s = p["b2s"].astype(f32)
    wg_pad = jnp.zeros((D, GP), md).at[:, :E].set(p["wg"].astype(md))
    bg_pad = jnp.full((1, GP), -1e30, f32).at[:, :E].set(p["bg"].astype(f32))
    # fused routed-expert weights
    w1cat = jnp.transpose(p["w1e"], (1, 0, 2)).reshape(D, EH).astype(md)   # (D, E*H)
    b1cat = p["b1e"].reshape(1, EH).astype(f32)
    w2cat = p["w2e"].reshape(EH, D).astype(md)                             # (E*H, D)
    b2pad = jnp.zeros((GP, D), md).at[:E, :].set(p["b2e"].astype(md))
    expand_blocks = jnp.kron(jnp.eye(E, dtype=f32), jnp.ones((1, H), f32)) # (E, E*H)
    expand = jnp.zeros((GP, EH), md).at[:E, :].set(expand_blocks.astype(md))
    gamma = p["gamma"].astype(f32)
    beta = p["beta"].astype(f32)

    plist = [w1s, b1s, w2s, b2s, wg_pad, bg_pad,
             w1cat, b1cat, w2cat, b2pad, expand, gamma, beta]

    def full_spec(a):
        nd = a.ndim
        return pl.BlockSpec(a.shape, lambda i, nd=nd: (0,) * nd)

    kernel = functools.partial(
        shared_moe_kernel,
        n_tokens=N,
        w_shared=float(expert_weights[0]),
        w_routed=float(expert_weights[1]),
        ln_eps=float(ln_eps),
        mxu_dtype=md,
    )

    # ---- advisory cost estimate for XLA scheduling ----
    flops = 2 * N_pad * (2 * D * H + D * GP + 2 * D * EH + GP * EH + GP * D)
    bytes_params = sum(int(np.prod(a.shape)) * a.dtype.itemsize for a in plist)
    bytes_accessed = bytes_params + 2 * N_pad * D * 4 + num_tiles * 2 * GP * 4
    cost = pl.CostEstimate(flops=int(flops),
                           transcendentals=int(N_pad * (GP + 2)),
                           bytes_accessed=int(bytes_accessed))

    # ---- explicit VMEM budget (weights resident, double-buffered x/y tiles) ----
    tile_io_bytes = 2 * tile_n * D * 4                        # x in + y out (f32)
    inter_bytes = tile_n * (3 * EH + 3 * GP + 4 * D + 2 * H) * 4
    vmem_est = 2 * bytes_params + 2 * tile_io_bytes + inter_bytes + (4 << 20)
    vmem_limit = int(min(max(vmem_est, 16 << 20), 64 << 20))  # stay inside v7x's 64 MiB

    y, stats = pl.pallas_call(
        kernel,
        out_shape=(
            jax.ShapeDtypeStruct((N_pad, D), x.dtype),
            jax.ShapeDtypeStruct((num_tiles, 2, GP), jnp.float32),
        ),
        grid=(num_tiles,),
        in_specs=[pl.BlockSpec((tile_n, D), lambda i: (i, 0))]
        + [full_spec(a) for a in plist],
        out_specs=(
            pl.BlockSpec((tile_n, D), lambda i: (i, 0)),
            pl.BlockSpec((None, 2, GP), lambda i: (i, 0, 0)),   # per-tile stats block
        ),
        compiler_params=pltpu.CompilerParams(
            dimension_semantics=("parallel",),                  # safe: no cross-step accumulation
            vmem_limit_bytes=vmem_limit,
        ),
        cost_estimate=cost,
    )(xf, *plist)

    # Finalize Switch-style aux loss: E * sum_e (frac_tokens_e * mean_prob_e)
    stats_sum = jnp.sum(stats, axis=0)            # (2, GP)
    sum_probs = stats_sum[0, :E]
    counts = stats_sum[1, :E]
    loss = num_experts * jnp.sum((counts / N) * (sum_probs / N))
    return y[:N].reshape(B, S, D), loss


def shared_moe_fnn_reference(x, params, *, num_experts, expert_weights, ln_eps=1e-5):
    """Pure-JAX reference with identical math, for verification."""
    B, S, D = x.shape
    N = B * S
    xf = x.reshape(N, D).astype(jnp.float32)
    p = params
    h = jnp.maximum(xf @ p["w1s"] + p["b1s"], 0.0)
    x1 = h @ p["w2s"] + p["b2s"]
    logits = xf @ p["wg"] + p["bg"]
    probs = jax.nn.softmax(logits, axis=-1)
    x2 = jnp.zeros_like(x1)
    for e in range(num_experts):
        he = jnp.maximum(xf @ p["w1e"][e] + p["b1e"][e], 0.0)
        x2 = x2 + probs[:, e:e + 1] * (he @ p["w2e"][e] + p["b2e"][e])
    y = expert_weights[0] * x1 + expert_weights[1] * x2 + xf
    mu = jnp.mean(y, axis=-1, keepdims=True)
    var = jnp.mean((y - mu) ** 2, axis=-1, keepdims=True)
    y = (y - mu) * lax.rsqrt(var + ln_eps) * p["gamma"] + p["beta"]
    onehot = jax.nn.one_hot(jnp.argmax(logits, axis=-1), num_experts, dtype=jnp.float32)
    loss = num_experts * jnp.sum((jnp.sum(onehot, 0) / N) * (jnp.sum(probs, 0) / N))
    return y.reshape(B, S, D), loss


def init_params(key, input_dim, hidden_dim, num_experts):
    ks = jax.random.split(key, 8)
    s = 0.05
    return {
        "w1s": s * jax.random.normal(ks[0], (input_dim, hidden_dim), jnp.float32),
        "b1s": s * jax.random.normal(ks[1], (1, hidden_dim), jnp.float32),
        "w2s": s * jax.random.normal(ks[2], (hidden_dim, input_dim), jnp.float32),
        "b2s": s * jax.random.normal(ks[3], (1, input_dim), jnp.float32),
        "wg": s * jax.random.normal(ks[4], (input_dim, num_experts), jnp.float32),
        "bg": jnp.zeros((1, num_experts), jnp.float32),
        "w1e": s * jax.random.normal(ks[5], (num_experts, input_dim, hidden_dim), jnp.float32),
        "b1e": jnp.zeros((num_experts, hidden_dim), jnp.float32),
        "w2e": s * jax.random.normal(ks[6], (num_experts, hidden_dim, input_dim), jnp.float32),
        "b2e": jnp.zeros((num_experts, input_dim), jnp.float32),
        "gamma": jnp.ones((1, input_dim), jnp.float32),
        "beta": jnp.zeros((1, input_dim), jnp.float32),
    }


if __name__ == "__main__":
    expert_weights = (0.6, 0.4)

    # Case 1: small shapes consistent with the module spec (single tile).
    B, S, D, H, E = 2, 8, 32, 64, 4
    kx, kp = jax.random.split(jax.random.PRNGKey(0))
    x = jax.random.normal(kx, (B, S, D), jnp.float32)
    params = init_params(kp, D, H, E)
    y, loss = shared_moe_fnn(x, params, num_experts=E, expert_weights=expert_weights)
    y = jax.block_until_ready(y)
    loss = jax.block_until_ready(loss)
    y_ref, loss_ref = shared_moe_fnn_reference(
        x, params, num_experts=E, expert_weights=expert_weights)
    np.testing.assert_allclose(np.asarray(y), np.asarray(y_ref), atol=1e-3, rtol=1e-3)
    np.testing.assert_allclose(np.asarray(loss), np.asarray(loss_ref), atol=1e-3, rtol=1e-3)

    # Case 2: multi-tile grid with token padding (exercises masked stats + parallel axis).
    B2, S2, D2, H2, E2 = 4, 96, 128, 128, 4
    kx2, kp2 = jax.random.split(jax.random.PRNGKey(1))
    x2 = jax.random.normal(kx2, (B2, S2, D2), jnp.float32)
    params2 = init_params(kp2, D2, H2, E2)
    y2, loss2 = shared_moe_fnn(x2, params2, num_experts=E2,
                               expert_weights=expert_weights, tile_n=256)
    y2 = jax.block_until_ready(y2)
    loss2 = jax.block_until_ready(loss2)
    y2_ref, loss2_ref = shared_moe_fnn_reference(
        x2, params2, num_experts=E2, expert_weights=expert_weights)
    np.testing.assert_allclose(np.asarray(y2), np.asarray(y2_ref), atol=1e-3, rtol=1e-3)
    np.testing.assert_allclose(np.asarray(loss2), np.asarray(loss2_ref), atol=1e-3, rtol=1e-3)

    # bf16-MXU-operand perf configuration: check it runs and is finite.
    y3, loss3 = shared_moe_fnn(x2, params2, num_experts=E2, expert_weights=expert_weights,
                               tile_n=256, mxu_dtype=jnp.bfloat16)
    y3 = jax.block_until_ready(y3)
    assert bool(jnp.all(jnp.isfinite(y3))) and bool(jnp.isfinite(loss3))

    print("KERNEL_OK")
</pallas_src>

<mosaic_0001>
module attributes {stable_mosaic.version = 11 : i64} {
  func.func @shared_moe_kernel(%arg0: i32, %arg1: memref<16x32xf32, #tpu.memory_space<vmem>>, %arg2: memref<32x64xf32, #tpu.memory_space<vmem>>, %arg3: memref<1x64xf32, #tpu.memory_space<vmem>>, %arg4: memref<64x32xf32, #tpu.memory_space<vmem>>, %arg5: memref<1x32xf32, #tpu.memory_space<vmem>>, %arg6: memref<32x128xf32, #tpu.memory_space<vmem>>, %arg7: memref<1x128xf32, #tpu.memory_space<vmem>>, %arg8: memref<32x256xf32, #tpu.memory_space<vmem>>, %arg9: memref<1x256xf32, #tpu.memory_space<vmem>>, %arg10: memref<256x32xf32, #tpu.memory_space<vmem>>, %arg11: memref<128x32xf32, #tpu.memory_space<vmem>>, %arg12: memref<128x256xf32, #tpu.memory_space<vmem>>, %arg13: memref<1x32xf32, #tpu.memory_space<vmem>>, %arg14: memref<1x32xf32, #tpu.memory_space<vmem>>, %arg15: memref<16x32xf32, #tpu.memory_space<vmem>>, %arg16: memref<1x2x128xf32, #tpu.memory_space<vmem>>) attributes {dimension_semantics = [#tpu.dimension_semantics<parallel>], iteration_bounds = array<i64: 1>, scalar_prefetch = 0 : i64, scratch_operands = 0 : i64, tpu.core_type = #tpu.core_type<tc>, window_params = [{transform_indices = @transform_0, window_bounds = array<i64: 16, 32>}, {pipeline_mode = #tpu.pipeline_mode<synchronous>, transform_indices = @transform_1, window_bounds = array<i64: 32, 64>}, {pipeline_mode = #tpu.pipeline_mode<synchronous>, transform_indices = @transform_2, window_bounds = array<i64: 1, 64>}, {pipeline_mode = #tpu.pipeline_mode<synchronous>, transform_indices = @transform_3, window_bounds = array<i64: 64, 32>}, {pipeline_mode = #tpu.pipeline_mode<synchronous>, transform_indices = @transform_4, window_bounds = array<i64: 1, 32>}, {pipeline_mode = #tpu.pipeline_mode<synchronous>, transform_indices = @transform_5, window_bounds = array<i64: 32, 128>}, {pipeline_mode = #tpu.pipeline_mode<synchronous>, transform_indices = @transform_6, window_bounds = array<i64: 1, 128>}, {pipeline_mode = #tpu.pipeline_mode<synchronous>, transform_indices = @transform_7, window_bounds = array<i64: 32, 256>}, {pipeline_mode = #tpu.pipeline_mode<synchronous>, transform_indices = @transform_8, window_bounds = array<i64: 1, 256>}, {pipeline_mode = #tpu.pipeline_mode<synchronous>, transform_indices = @transform_9, window_bounds = array<i64: 256, 32>}, {pipeline_mode = #tpu.pipeline_mode<synchronous>, transform_indices = @transform_10, window_bounds = array<i64: 128, 32>}, {pipeline_mode = #tpu.pipeline_mode<synchronous>, transform_indices = @transform_11, window_bounds = array<i64: 128, 256>}, {pipeline_mode = #tpu.pipeline_mode<synchronous>, transform_indices = @transform_12, window_bounds = array<i64: 1, 32>}, {pipeline_mode = #tpu.pipeline_mode<synchronous>, transform_indices = @transform_13, window_bounds = array<i64: 1, 32>}, {transform_indices = @transform_14, window_bounds = array<i64: 16, 32>}, {transform_indices = @transform_15, window_bounds = array<i64: 1, 2, 128>}]} {
    %c0 = arith.constant 0 : index
    %c0_0 = arith.constant 0 : index
    %0 = vector.load %arg1[%c0, %c0_0] : memref<16x32xf32, #tpu.memory_space<vmem>>, vector<16x32xf32>
    %c0_1 = arith.constant 0 : index
    %c0_2 = arith.constant 0 : index
    %1 = vector.load %arg1[%c0_1, %c0_2] : memref<16x32xf32, #tpu.memory_space<vmem>>, vector<16x32xf32>
    %c0_3 = arith.constant 0 : index
    %c0_4 = arith.constant 0 : index
    %2 = vector.load %arg2[%c0_3, %c0_4] : memref<32x64xf32, #tpu.memory_space<vmem>>, vector<32x64xf32>
    %cst = arith.constant dense<0.000000e+00> : vector<16x64xf32>
    %3 = tpu.matmul %1, %2, %cst {dimension_numbers = #tpu.dot_dimension_numbers<[1], [0], [0], [1], [0, 0, 1, 1], [], []>} : vector<16x32xf32>, vector<32x64xf32>, vector<16x64xf32> -> vector<16x64xf32>
    %c0_5 = arith.constant 0 : index
    %c0_6 = arith.constant 0 : index
    %4 = vector.load %arg3[%c0_5, %c0_6] : memref<1x64xf32, #tpu.memory_space<vmem>>, vector<1x64xf32>
    %5 = vector.broadcast %4 : vector<1x64xf32> to vector<16x64xf32>
    %6 = arith.addf %3, %5 : vector<16x64xf32>
    %cst_7 = arith.constant 0.000000e+00 : f32
    %7 = vector.broadcast %cst_7 : f32 to vector<16x64xf32>
    %8 = arith.maximumf %6, %7 : vector<16x64xf32>
    %c0_8 = arith.constant 0 : index
    %c0_9 = arith.constant 0 : index
    %9 = vector.load %arg4[%c0_8, %c0_9] : memref<64x32xf32, #tpu.memory_space<vmem>>, vector<64x32xf32>
    %cst_10 = arith.constant dense<0.000000e+00> : vector<16x32xf32>
    %10 = tpu.matmul %8, %9, %cst_10 {dimension_numbers = #tpu.dot_dimension_numbers<[1], [0], [0], [1], [0, 0, 1, 1], [], []>} : vector<16x64xf32>, vector<64x32xf32>, vector<16x32xf32> -> vector<16x32xf32>
    %c0_11 = arith.constant 0 : index
    %c0_12 = arith.constant 0 : index
    %11 = vector.load %arg5[%c0_11, %c0_12] : memref<1x32xf32, #tpu.memory_space<vmem>>, vector<1x32xf32>
    %12 = vector.broadcast %11 : vector<1x32xf32> to vector<16x32xf32>
    %13 = arith.addf %10, %12 : vector<16x32xf32>
    %c0_13 = arith.constant 0 : index
    %c0_14 = arith.constant 0 : index
    %14 = vector.load %arg6[%c0_13, %c0_14] : memref<32x128xf32, #tpu.memory_space<vmem>>, vector<32x128xf32>
    %cst_15 = arith.constant dense<0.000000e+00> : vector<16x128xf32>
    %15 = tpu.matmul %1, %14, %cst_15 {dimension_numbers = #tpu.dot_dimension_numbers<[1], [0], [0], [1], [0, 0, 1, 1], [], []>} : vector<16x32xf32>, vector<32x128xf32>, vector<16x128xf32> -> vector<16x128xf32>
    %c0_16 = arith.constant 0 : index
    %c0_17 = arith.constant 0 : index
    %16 = vector.load %arg7[%c0_16, %c0_17] : memref<1x128xf32, #tpu.memory_space<vmem>>, vector<1x128xf32>
    %17 = vector.broadcast %16 : vector<1x128xf32> to vector<16x128xf32>
    %18 = arith.addf %15, %17 : vector<16x128xf32>
    %cst_18 = arith.constant dense<0xFF800000> : vector<16xf32>
    %19 = vector.multi_reduction <maximumf>, %18, %cst_18 [1] : vector<16x128xf32> to vector<16xf32>
    %20 = vector.shape_cast %19 : vector<16xf32> to vector<16x1xf32>
    %21 = vector.broadcast %20 : vector<16x1xf32> to vector<16x128xf32>
    %22 = arith.subf %18, %21 : vector<16x128xf32>
    %23 = math.exp %22 : vector<16x128xf32>
    %cst_19 = arith.constant dense<0.000000e+00> : vector<16xf32>
    %24 = vector.multi_reduction <add>, %23, %cst_19 [1] : vector<16x128xf32> to vector<16xf32>
    %25 = vector.shape_cast %24 : vector<16xf32> to vector<16x1xf32>
    %26 = tpu.reciprocal %25 {approx = true} : vector<16x1xf32> -> vector<16x1xf32>
    %27 = vector.broadcast %26 : vector<16x1xf32> to vector<16x128xf32>
    %28 = arith.mulf %23, %27 : vector<16x128xf32>
    %c0_20 = arith.constant 0 : index
    %c0_21 = arith.constant 0 : index
    %29 = vector.load %arg8[%c0_20, %c0_21] : memref<32x256xf32, #tpu.memory_space<vmem>>, vector<32x256xf32>
    %cst_22 = arith.constant dense<0.000000e+00> : vector<16x256xf32>
    %30 = tpu.matmul %1, %29, %cst_22 {dimension_numbers = #tpu.dot_dimension_numbers<[1], [0], [0], [1], [0, 0, 1, 1], [], []>} : vector<16x32xf32>, vector<32x256xf32>, vector<16x256xf32> -> vector<16x256xf32>
    %c0_23 = arith.constant 0 : index
    %c0_24 = arith.constant 0 : index
    %31 = vector.load %arg9[%c0_23, %c0_24] : memref<1x256xf32, #tpu.memory_space<vmem>>, vector<1x256xf32>
    %32 = vector.broadcast %31 : vector<1x256xf32> to vector<16x256xf32>
    %33 = arith.addf %30, %32 : vector<16x256xf32>
    %cst_25 = arith.constant 0.000000e+00 : f32
    %34 = vector.broadcast %cst_25 : f32 to vector<16x256xf32>
    %35 = arith.maximumf %33, %34 : vector<16x256xf32>
    %c0_26 = arith.constant 0 : index
    %c0_27 = arith.constant 0 : index
    %36 = vector.load %arg12[%c0_26, %c0_27] : memref<128x256xf32, #tpu.memory_space<vmem>>, vector<128x256xf32>
    %cst_28 = arith.constant dense<0.000000e+00> : vector<16x256xf32>
    %37 = tpu.matmul %28, %36, %cst_28 {dimension_numbers = #tpu.dot_dimension_numbers<[1], [0], [0], [1], [0, 0, 1, 1], [], []>} : vector<16x128xf32>, vector<128x256xf32>, vector<16x256xf32> -> vector<16x256xf32>
    %38 = arith.mulf %35, %37 : vector<16x256xf32>
    %c0_29 = arith.constant 0 : index
    %c0_30 = arith.constant 0 : index
    %39 = vector.load %arg10[%c0_29, %c0_30] : memref<256x32xf32, #tpu.memory_space<vmem>>, vector<256x32xf32>
    %cst_31 = arith.constant dense<0.000000e+00> : vector<16x32xf32>
    %40 = tpu.matmul %38, %39, %cst_31 {dimension_numbers = #tpu.dot_dimension_numbers<[1], [0], [0], [1], [0, 0, 1, 1], [], []>} : vector<16x256xf32>, vector<256x32xf32>, vector<16x32xf32> -> vector<16x32xf32>
    %c0_32 = arith.constant 0 : index
    %c0_33 = arith.constant 0 : index
    %41 = vector.load %arg11[%c0_32, %c0_33] : memref<128x32xf32, #tpu.memory_space<vmem>>, vector<128x32xf32>
    %cst_34 = arith.constant dense<0.000000e+00> : vector<16x32xf32>
    %42 = tpu.matmul %28, %41, %cst_34 {dimension_numbers = #tpu.dot_dimension_numbers<[1], [0], [0], [1], [0, 0, 1, 1], [], []>} : vector<16x128xf32>, vector<128x32xf32>, vector<16x32xf32> -> vector<16x32xf32>
    %43 = arith.addf %40, %42 : vector<16x32xf32>
    %cst_35 = arith.constant 6.000000e-01 : f32
    %44 = vector.broadcast %cst_35 : f32 to vector<16x32xf32>
    %45 = arith.mulf %44, %13 : vector<16x32xf32>
    %cst_36 = arith.constant 4.000000e-01 : f32
    %46 = vector.broadcast %cst_36 : f32 to vector<16x32xf32>
    %47 = arith.mulf %46, %43 : vector<16x32xf32>
    %48 = arith.addf %45, %47 : vector<16x32xf32>
    %49 = arith.addf %48, %0 : vector<16x32xf32>
    %cst_37 = arith.constant dense<0.000000e+00> : vector<16xf32>
    %50 = vector.multi_reduction <add>, %49, %cst_37 [1] : vector<16x32xf32> to vector<16xf32>
    %51 = vector.shape_cast %50 : vector<16xf32> to vector<16x1xf32>
    %cst_38 = arith.constant 3.200000e+01 : f32
    %52 = vector.broadcast %cst_38 : f32 to vector<16x1xf32>
    %53 = arith.divf %51, %52 : vector<16x1xf32>
    %54 = vector.broadcast %53 : vector<16x1xf32> to vector<16x32xf32>
    %55 = arith.subf %49, %54 : vector<16x32xf32>
    %56 = arith.mulf %55, %55 : vector<16x32xf32>
    %cst_39 = arith.constant dense<0.000000e+00> : vector<16xf32>
    %57 = vector.multi_reduction <add>, %56, %cst_39 [1] : vector<16x32xf32> to vector<16xf32>
    %58 = vector.shape_cast %57 : vector<16xf32> to vector<16x1xf32>
    %cst_40 = arith.constant 3.200000e+01 : f32
    %59 = vector.broadcast %cst_40 : f32 to vector<16x1xf32>
    %60 = arith.divf %58, %59 : vector<16x1xf32>
    %61 = vector.broadcast %53 : vector<16x1xf32> to vector<16x32xf32>
    %62 = arith.subf %49, %61 : vector<16x32xf32>
    %cst_41 = arith.constant 9.99999974E-6 : f32
    %63 = vector.broadcast %cst_41 : f32 to vector<16x1xf32>
    %64 = arith.addf %60, %63 : vector<16x1xf32>
    %65 = math.rsqrt %64 : vector<16x1xf32>
    %66 = vector.broadcast %65 : vector<16x1xf32> to vector<16x32xf32>
    %67 = arith.mulf %62, %66 : vector<16x32xf32>
    %c0_42 = arith.constant 0 : index
    %c0_43 = arith.constant 0 : index
    %68 = vector.load %arg13[%c0_42, %c0_43] : memref<1x32xf32, #tpu.memory_space<vmem>>, vector<1x32xf32>
    %69 = vector.broadcast %68 : vector<1x32xf32> to vector<16x32xf32>
    %70 = arith.mulf %67, %69 : vector<16x32xf32>
    %c0_44 = arith.constant 0 : index
    %c0_45 = arith.constant 0 : index
    %71 = vector.load %arg14[%c0_44, %c0_45] : memref<1x32xf32, #tpu.memory_space<vmem>>, vector<1x32xf32>
    %72 = vector.broadcast %71 : vector<1x32xf32> to vector<16x32xf32>
    %73 = arith.addf %70, %72 : vector<16x32xf32>
    %c0_46 = arith.constant 0 : index
    %c0_47 = arith.constant 0 : index
    %74 = vector.load %arg15[%c0_46, %c0_47] : memref<16x32xf32, #tpu.memory_space<vmem>>, vector<16x32xf32>
    tpu.vector_store %arg15[%c0_46, %c0_47], %73 {strides = array<i32>} : memref<16x32xf32, #tpu.memory_space<vmem>>, vector<16x32xf32>,
    %c16_i32 = arith.constant 16 : i32
    %75 = arith.muli %arg0, %c16_i32 : i32
    %76 = tpu.iota {dimensions = array<i32: 0>} : vector<16x1xi32>
    %77 = vector.broadcast %75 : i32 to vector<16x1xi32>
    %78 = arith.addi %77, %76 : vector<16x1xi32>
    %c16_i32_48 = arith.constant 16 : i32
    %79 = vector.broadcast %c16_i32_48 : i32 to vector<16x1xi32>
    %80 = arith.cmpi slt, %78, %79 : vector<16x1xi32>
    %81 = tpu.iota {dimensions = array<i32: 1>} : vector<16x128xi32>
    %82 = vector.broadcast %20 : vector<16x1xf32> to vector<16x128xf32>
    %83 = arith.cmpf oge, %18, %82 : vector<16x128xf32>
    %c128_i32 = arith.constant 128 : i32
    %84 = vector.broadcast %c128_i32 : i32 to vector<16x128xi32>
    %85 = arith.select %83, %81, %84 : vector<16x128xi1>, vector<16x128xi32>
    %cst_49 = arith.constant dense<2147483647> : vector<16xi32>
    %86 = vector.multi_reduction <minsi>, %85, %cst_49 [1] : vector<16x128xi32> to vector<16xi32>
    %87 = vector.shape_cast %86 : vector<16xi32> to vector<16x1xi32>
    %88 = vector.broadcast %87 : vector<16x1xi32> to vector<16x128xi32>
    %89 = arith.cmpi eq, %81, %88 : vector<16x128xi32>
    %90 = arith.extui %89 : vector<16x128xi1> to vector<16x128xi32>
    %91 = arith.sitofp %90 : vector<16x128xi32> to vector<16x128xf32>
    %cst_50 = arith.constant 0.000000e+00 : f32
    %92 = vector.shape_cast %80 : vector<16x1xi1> to vector<16x1xi1>
    %93 = vector.broadcast %92 : vector<16x1xi1> to vector<16x128xi1>
    %94 = vector.broadcast %cst_50 : f32 to vector<16x128xf32>
    %95 = arith.select %93, %28, %94 : vector<16x128xi1>, vector<16x128xf32>
    %cst_51 = arith.constant 0.000000e+00 : f32
    %96 = vector.shape_cast %80 : vector<16x1xi1> to vector<16x1xi1>
    %97 = vector.broadcast %96 : vector<16x1xi1> to vector<16x128xi1>
    %98 = vector.broadcast %cst_51 : f32 to vector<16x128xf32>
    %99 = arith.select %97, %91, %98 : vector<16x128xi1>, vector<16x128xf32>
    %cst_52 = arith.constant dense<0.000000e+00> : vector<128xf32>
    %100 = vector.multi_reduction <add>, %95, %cst_52 [0] : vector<16x128xf32> to vector<128xf32>
    %101 = vector.shape_cast %100 : vector<128xf32> to vector<1x128xf32>
    %c0_53 = arith.constant 0 : index
    %c0_54 = arith.constant 0 : index
    %c0_55 = arith.constant 0 : index
    %102 = vector.load %arg16[%c0_53, %c0_54, %c0_55] : memref<1x2x128xf32, #tpu.memory_space<vmem>>, vector<1x1x128xf32>
    %103 = vector.shape_cast %102 : vector<1x1x128xf32> to vector<1x128xf32>
    %104 = vector.shape_cast %101 : vector<1x128xf32> to vector<1x1x128xf32>
    tpu.vector_store %arg16[%c0_53, %c0_54, %c0_55], %104 {strides = array<i32>} : memref<1x2x128xf32, #tpu.memory_space<vmem>>, vector<1x1x128xf32>,
    %cst_56 = arith.constant dense<0.000000e+00> : vector<128xf32>
    %105 = vector.multi_reduction <add>, %99, %cst_56 [0] : vector<16x128xf32> to vector<128xf32>
    %106 = vector.shape_cast %105 : vector<128xf32> to vector<1x128xf32>
    %c0_57 = arith.constant 0 : index
    %c1 = arith.constant 1 : index
    %c0_58 = arith.constant 0 : index
    %107 = vector.load %arg16[%c0_57, %c1, %c0_58] : memref<1x2x128xf32, #tpu.memory_space<vmem>>, vector<1x1x128xf32>
    %108 = vector.shape_cast %107 : vector<1x1x128xf32> to vector<1x128xf32>
    %109 = vector.shape_cast %106 : vector<1x128xf32> to vector<1x1x128xf32>
    tpu.vector_store %arg16[%c0_57, %c1, %c0_58], %109 {strides = array<i32>} : memref<1x2x128xf32, #tpu.memory_space<vmem>>, vector<1x1x128xf32>,
    return
  }
  func.func @transform_0(%arg0: i32) -> (i32, i32) {
    %c0_i32 = arith.constant 0 : i32
    %c0_i32_0 = arith.constant 0 : i32
    return %arg0, %c0_i32 : i32, i32
  }
  func.func @transform_1(%arg0: i32) -> (i32, i32) {
    %c0_i32 = arith.constant 0 : i32
    %c0_i32_0 = arith.constant 0 : i32
    %c0_i32_1 = arith.constant 0 : i32
    return %c0_i32, %c0_i32_0 : i32, i32
  }
  func.func @transform_2(%arg0: i32) -> (i32, i32) {
    %c0_i32 = arith.constant 0 : i32
    %c0_i32_0 = arith.constant 0 : i32
    %c0_i32_1 = arith.constant 0 : i32
    return %c0_i32, %c0_i32_0 : i32, i32
  }
  func.func @transform_3(%arg0: i32) -> (i32, i32) {
    %c0_i32 = arith.constant 0 : i32
    %c0_i32_0 = arith.constant 0 : i32
    %c0_i32_1 = arith.constant 0 : i32
    return %c0_i32, %c0_i32_0 : i32, i32
  }
  func.func @transform_4(%arg0: i32) -> (i32, i32) {
    %c0_i32 = arith.constant 0 : i32
    %c0_i32_0 = arith.constant 0 : i32
    %c0_i32_1 = arith.constant 0 : i32
    return %c0_i32, %c0_i32_0 : i32, i32
  }
  func.func @transform_5(%arg0: i32) -> (i32, i32) {
    %c0_i32 = arith.constant 0 : i32
    %c0_i32_0 = arith.constant 0 : i32
    %c0_i32_1 = arith.constant 0 : i32
    return %c0_i32, %c0_i32_0 : i32, i32
  }
  func.func @transform_6(%arg0: i32) -> (i32, i32) {
    %c0_i32 = arith.constant 0 : i32
    %c0_i32_0 = arith.constant 0 : i32
    %c0_i32_1 = arith.constant 0 : i32
    return %c0_i32, %c0_i32_0 : i32, i32
  }
  func.func @transform_7(%arg0: i32) -> (i32, i32) {
    %c0_i32 = arith.constant 0 : i32
    %c0_i32_0 = arith.constant 0 : i32
    %c0_i32_1 = arith.constant 0 : i32
    return %c0_i32, %c0_i32_0 : i32, i32
  }
  func.func @transform_8(%arg0: i32) -> (i32, i32) {
    %c0_i32 = arith.constant 0 : i32
    %c0_i32_0 = arith.constant 0 : i32
    %c0_i32_1 = arith.constant 0 : i32
    return %c0_i32, %c0_i32_0 : i32, i32
  }
  func.func @transform_9(%arg0: i32) -> (i32, i32) {
    %c0_i32 = arith.constant 0 : i32
    %c0_i32_0 = arith.constant 0 : i32
    %c0_i32_1 = arith.constant 0 : i32
    return %c0_i32, %c0_i32_0 : i32, i32
  }
  func.func @transform_10(%arg0: i32) -> (i32, i32) {
    %c0_i32 = arith.constant 0 : i32
    %c0_i32_0 = arith.constant 0 : i32
    %c0_i32_1 = arith.constant 0 : i32
    return %c0_i32, %c0_i32_0 : i32, i32
  }
  func.func @transform_11(%arg0: i32) -> (i32, i32) {
    %c0_i32 = arith.constant 0 : i32
    %c0_i32_0 = arith.constant 0 : i32
    %c0_i32_1 = arith.constant 0 : i32
    return %c0_i32, %c0_i32_0 : i32, i32
  }
  func.func @transform_12(%arg0: i32) -> (i32, i32) {
    %c0_i32 = arith.constant 0 : i32
    %c0_i32_0 = arith.constant 0 : i32
    %c0_i32_1 = arith.constant 0 : i32
    return %c0_i32, %c0_i32_0 : i32, i32
  }
  func.func @transform_13(%arg0: i32) -> (i32, i32) {
    %c0_i32 = arith.constant 0 : i32
    %c0_i32_0 = arith.constant 0 : i32
    %c0_i32_1 = arith.constant 0 : i32
    return %c0_i32, %c0_i32_0 : i32, i32
  }
  func.func @transform_14(%arg0: i32) -> (i32, i32) {
    %c0_i32 = arith.constant 0 : i32
    %c0_i32_0 = arith.constant 0 : i32
    return %arg0, %c0_i32 : i32, i32
  }
  func.func @transform_15(%arg0: i32) -> (i32, i32, i32) {
    %c0_i32 = arith.constant 0 : i32
    %c0_i32_0 = arith.constant 0 : i32
    %c0_i32_1 = arith.constant 0 : i32
    return %arg0, %c0_i32, %c0_i32_0 : i32, i32, i32
  }
}

</mosaic_0001>

<llo_original>
// kernel: tpu_custom_call.1
$region0: #{tpu_custom_call.1}
  #allocation0 [shape = 'u32[]', space=smem, size = 0x4, offset = 0x4, fixed_abs, tag = 'smem constant byte address 0x4 - core index']
  #allocation1 [shape = 'u32[144,128]{1,0:T(1,128)}', space=vmem, size = 0x12000, scoped, tag = 'internal scratch']
  %s0 = inlined_call_operand.vmem [shape: f32[16,32], index: 0, kind: input, shape index: {}]
  %s1 = inlined_call_operand.vmem [shape: f32[32,64], index: 1, kind: input, shape index: {}]
  %s2 = inlined_call_operand.vmem [shape: f32[1,64], index: 2, kind: input, shape index: {}]
  %s3 = inlined_call_operand.vmem [shape: f32[64,32], index: 3, kind: input, shape index: {}]
  %s4 = inlined_call_operand.vmem [shape: f32[1,32], index: 4, kind: input, shape index: {}]
  %s5 = inlined_call_operand.vmem [shape: f32[32,128], index: 5, kind: input, shape index: {}]
  %s6 = inlined_call_operand.vmem [shape: f32[1,128], index: 6, kind: input, shape index: {}]
  %s7 = inlined_call_operand.vmem [shape: f32[32,256], index: 7, kind: input, shape index: {}]
  %s8 = inlined_call_operand.vmem [shape: f32[1,256], index: 8, kind: input, shape index: {}]
  %s9 = inlined_call_operand.vmem [shape: f32[256,32], index: 9, kind: input, shape index: {}]
  %s10 = inlined_call_operand.vmem [shape: f32[128,32], index: 10, kind: input, shape index: {}]
  %s11 = inlined_call_operand.vmem [shape: f32[128,256], index: 11, kind: input, shape index: {}]
  %s12 = inlined_call_operand.vmem [shape: f32[1,32], index: 12, kind: input, shape index: {}]
  %s13 = inlined_call_operand.vmem [shape: f32[1,32], index: 13, kind: input, shape index: {}]
  %s14 = inlined_call_operand.hbm [shape: f32[16,32], index: 14, kind: output, shape index: {0}]
  %s15 = inlined_call_operand.hbm [shape: f32[1,2,128], index: 15, kind: output, shape index: {1}]
  %16 = xla_tuple %s14, %s15
  %s17 = sld [smem:[#allocation0]]
  $region74: #{tpu_custom_call.1} parent=0
    _
  %s19 = ssub.s32 1, %s17
  %s20 = scalar_select 0, %s19, %s17
  $region1: #{tpu_custom_call.1} parent=0
    #allocation2 [shape = 'u8[8192]{0}', space=vmem, size = 0x2000, scoped, tag = 'output window, operand 0, single buffered']
    #allocation3 [shape = 's32[1]{0}', space=sflag, size = 0x4, scoped, tag = 'scoped memory for tpu_custom_call.1']
    #allocation4 [shape = 'u8[1024]{0}', space=vmem, size = 0x400, scoped, tag = 'output window, operand 1, single buffered']
    #allocation5 [shape = 's32[1]{0}', space=sflag, size = 0x4, scoped, tag = 'scoped memory for tpu_custom_call.1']
    %21 = vsyncpa [#allocation3], 0
    %22 = vsyncpa [#allocation5], 0
    // Predicated region
    $region2: #{tpu_custom_call.1} parent=1 // pred_check
      _
    $region3: #{tpu_custom_call.1} parent=1 // pred_check_branch
      %24 = sbr.rel (0) target = $region5
    $region4: #{tpu_custom_call.1} parent=1 // pred_region
      _
    $region5: #{tpu_custom_call.1} parent=1 // pred_fallthru
      _
    // Predicated region
    $region6: #{tpu_custom_call.1} parent=1 // pred_check
      _
    $region7: #{tpu_custom_call.1} parent=1 // pred_check_branch
      %26 = sbr.rel (0) target = $region9
    $region8: #{tpu_custom_call.1} parent=1 // pred_region
      _
    $region9: #{tpu_custom_call.1} parent=1 // pred_fallthru
      _
    // Predicated region
    $region10: #{tpu_custom_call.1} parent=1 // pred_check
      _
    $region11: #{tpu_custom_call.1} parent=1 // pred_check_branch
      %28 = sbr.rel (0) target = $region13
    $region12: #{tpu_custom_call.1} parent=1 // pred_region
      _
    $region13: #{tpu_custom_call.1} parent=1 // pred_fallthru
      _
    // Predicated region
    $region14: #{tpu_custom_call.1} parent=1 // pred_check
      _
    $region15: #{tpu_custom_call.1} parent=1 // pred_check_branch
      %30 = sbr.rel (0) target = $region17
    $region16: #{tpu_custom_call.1} parent=1 // pred_region
      _
    $region17: #{tpu_custom_call.1} parent=1 // pred_fallthru
      _
    // Predicated region
    $region18: #{tpu_custom_call.1} parent=1 // pred_check
      _
    $region19: #{tpu_custom_call.1} parent=1 // pred_check_branch
      %32 = sbr.rel (0) target = $region21
    $region20: #{tpu_custom_call.1} parent=1 // pred_region
      _
    $region21: #{tpu_custom_call.1} parent=1 // pred_fallthru
      _
    // Predicated region
    $region22: #{tpu_custom_call.1} parent=1 // pred_check
      _
    $region23: #{tpu_custom_call.1} parent=1 // pred_check_branch
      %34 = sbr.rel (0) target = $region25
    $region24: #{tpu_custom_call.1} parent=1 // pred_region
      _
    $region25: #{tpu_custom_call.1} parent=1 // pred_fallthru
      _
    // Predicated region
    $region26: #{tpu_custom_call.1} parent=1 // pred_check
      _
    $region27: #{tpu_custom_call.1} parent=1 // pred_check_branch
      %36 = sbr.rel (0) target = $region29
    $region28: #{tpu_custom_call.1} parent=1 // pred_region
      _
    $region29: #{tpu_custom_call.1} parent=1 // pred_fallthru
      _
    // Predicated region
    $region30: #{tpu_custom_call.1} parent=1 // pred_check
      _
    $region31: #{tpu_custom_call.1} parent=1 // pred_check_branch
      %38 = sbr.rel (0) target = $region33
    $region32: #{tpu_custom_call.1} parent=1 // pred_region
      _
    $region33: #{tpu_custom_call.1} parent=1 // pred_fallthru
      _
    // Predicated region
    $region34: #{tpu_custom_call.1} parent=1 // pred_check
      _
    $region35: #{tpu_custom_call.1} parent=1 // pred_check_branch
      %40 = sbr.rel (0) target = $region37
    $region36: #{tpu_custom_call.1} parent=1 // pred_region
      _
    $region37: #{tpu_custom_call.1} parent=1 // pred_fallthru
      _
    // Predicated region
    $region38: #{tpu_custom_call.1} parent=1 // pred_check
      _
    $region39: #{tpu_custom_call.1} parent=1 // pred_check_branch
      %42 = sbr.rel (0) target = $region41
    $region40: #{tpu_custom_call.1} parent=1 // pred_region
      _
    $region41: #{tpu_custom_call.1} parent=1 // pred_fallthru
      _
    // Predicated region
    $region42: #{tpu_custom_call.1} parent=1 // pred_check
      _
    $region43: #{tpu_custom_call.1} parent=1 // pred_check_branch
      %44 = sbr.rel (0) target = $region45
    $region44: #{tpu_custom_call.1} parent=1 // pred_region
      _
    $region45: #{tpu_custom_call.1} parent=1 // pred_fallthru
      _
    // Predicated region
    $region46: #{tpu_custom_call.1} parent=1 // pred_check
      _
    $region47: #{tpu_custom_call.1} parent=1 // pred_check_branch
      %46 = sbr.rel (0) target = $region49
    $region48: #{tpu_custom_call.1} parent=1 // pred_region
      _
    $region49: #{tpu_custom_call.1} parent=1 // pred_fallthru
      _
    // Predicated region
    $region50: #{tpu_custom_call.1} parent=1 // pred_check
      _
    $region51: #{tpu_custom_call.1} parent=1 // pred_check_branch
      %48 = sbr.rel (0) target = $region53
    $region52: #{tpu_custom_call.1} parent=1 // pred_region
      _
    $region53: #{tpu_custom_call.1} parent=1 // pred_fallthru
      _
    // Predicated region
    $region54: #{tpu_custom_call.1} parent=1 // pred_check
      _
    $region55: #{tpu_custom_call.1} parent=1 // pred_check_branch
      %50 = sbr.rel (0) target = $region57
    $region56: #{tpu_custom_call.1} parent=1 // pred_region
      _
    $region57: #{tpu_custom_call.1} parent=1 // pred_fallthru
      _
    %v51 = vld [vmem:[%s0] sm:$0xff]
    %v52 = vld [vmem:[%s0 + $0x8] sm:$0xff]
    %v53 = vld [vmem:[%s1] sm:$0xff]
    %v54 = vld [vmem:[%s1 + $0x8] sm:$0xff]
    %v55 = vld [vmem:[%s1 + $0x10] sm:$0xff]
    %v56 = vld [vmem:[%s1 + $0x18] sm:$0xff]
    %v57 = vld [vmem:[%s2] sm:$0x1]
    %v59 = vlaneseq
    %v60 = vshrl.u32 %v59, 7
    %v61 = vsub.s32 0, %v60
    %v62 = vrot.slane %v57, %v61
    %vm64 = vcmask 261120
    %v66 = vsel %vm64, %v51, 0
    %v69 = vsel %vm64, %v52, 0
    %71 = vmatprep.subr.mxu0 0.0
    %72 = vmatpush1.msra.mxu0 %v53
    %73 = vmatprep.subr.mxu0 0.0
    %74 = vmatpush1.msra.mxu0 %v54
    %75 = vmatprep.subr.mxu0 0.0
    %76 = vmatpush1.msra.mxu0 %v55
    %77 = vmatprep.subr.mxu0 0.0
    %78 = vmatpush1.msra.mxu0 %v56
    %79 = vmatprep.subr.mxu0 0.0
    %80 = vmatpush1.msra.mxu0 0.0
    %81 = vmatprep.subr.mxu0 0.0
    %82 = vmatpush1.msra.mxu0 0.0
    %83 = vmatprep.subr.mxu0 0.0
    %84 = vmatpush1.msra.mxu0 0.0
    %85 = vmatprep.subr.mxu0 0.0
    %86 = vmatpush1.msra.mxu0 0.0
    %87 = vmatprep.subr.mxu0 0.0
    %88 = vmatpush1.msra.mxu0 0.0
    %89 = vmatprep.subr.mxu0 0.0
    %90 = vmatpush1.msra.mxu0 0.0
    %91 = vmatprep.subr.mxu0 0.0
    %92 = vmatpush1.msra.mxu0 0.0
    %93 = vmatprep.subr.mxu0 0.0
    %94 = vmatpush1.msra.mxu0 0.0
    %95 = vmatprep.subr.mxu0 0.0
    %96 = vmatpush1.msra.mxu0 0.0
    %97 = vmatprep.subr.mxu0 0.0
    %98 = vmatpush1.msra.mxu0 0.0
    %99 = vmatprep.subr.mxu0 0.0
    %100 = vmatpush1.msra.mxu0 0.0
    %101 = vmatprep.subr.mxu0 0.0
    %102 = vmatpush1.msra.mxu0 0.0
    %103 = vmatprep.subr.mxu0 0.0
    %104 = vmatpush1.msra.mxu0 0.0
    %105 = vmatprep.subr.mxu0 0.0
    %106 = vmatpush1.msra.mxu0 0.0
    %107 = vmatprep.subr.mxu0 0.0
    %108 = vmatpush1.msra.mxu0 0.0
    %109 = vmatprep.subr.mxu0 0.0
    %110 = vmatpush1.msra.mxu0 0.0
    %111 = vmatprep.subr.mxu0 0.0
    %112 = vmatpush1.msra.mxu0 0.0
    %113 = vmatprep.subr.mxu0 0.0
    %114 = vmatpush1.msra.mxu0 0.0
    %115 = vmatprep.subr.mxu0 0.0
    %116 = vmatpush1.msra.mxu0 0.0
    %117 = vmatprep.subr.mxu0 0.0
    %118 = vmatpush1.msra.mxu0 0.0
    %119 = vmatprep.subr.mxu0 0.0
    %120 = vmatpush1.msra.mxu0 0.0
    %121 = vmatprep.subr.mxu0 0.0
    %122 = vmatpush1.msra.mxu0 0.0
    %123 = vmatprep.subr.mxu0 0.0
    %124 = vmatpush1.msra.mxu0 0.0
    %125 = vmatprep.subr.mxu0 0.0
    %126 = vmatpush1.msra.mxu0 0.0
    %127 = vmatprep.subr.mxu0 0.0
    %128 = vmatpush1.msra.mxu0 0.0
    %129 = vmatprep.subr.mxu0 0.0
    %130 = vmatpush1.msra.mxu0 0.0
    %131 = vmatprep.subr.mxu0 0.0
    %132 = vmatpush1.msra.mxu0 0.0
    %133 = vmatprep.subr.mxu0 0.0
    %134 = vmatpush1.msra.mxu0 0.0
    %135 = vmatprep.mubr.f32.mxu0 0.0
    %136 = vmatmul.mubr.f32.gmra.mrb[0].mxu0 %v66
    %v137 = vpop.f32.mrb[0].mxu0
    %v138 = vadd.f32 %v62, %v137
    %v139 = vpop.f32.mrb[0].mxu0
    %140 = vmatprep.mubr.f32.mxu0 0.0
    %141 = vmatmul.mubr.f32.gmra.mrb[0].mxu0 %v69
    %v142 = vpop.f32.mrb[0].mxu0
    %v143 = vadd.f32 %v62, %v142
    %v144 = vpop.f32.mrb[0].mxu0
    %145 = vdwg.mxu0
    %v146 = vmax.f32 %v138, 0.0
    %v147 = vmax.f32 %v143, 0.0
    %v148 = vld [vmem:[%s3] sm:$0xff]
    %v149 = vld [vmem:[%s3 + $0x8] sm:$0xff]
    %v150 = vld [vmem:[%s3 + $0x10] sm:$0xff]
    %v151 = vld [vmem:[%s3 + $0x18] sm:$0xff]
    %v152 = vld [vmem:[%s3 + $0x20] sm:$0xff]
    %v153 = vld [vmem:[%s3 + $0x28] sm:$0xff]
    %v154 = vld [vmem:[%s3 + $0x30] sm:$0xff]
    %v155 = vld [vmem:[%s3 + $0x38] sm:$0xff]
    %v156 = vld [vmem:[%s4] sm:$0x1]
    %v158 = vlaneseq
    %v159 = vshrl.u32 %v158, 7
    %v160 = vsub.s32 0, %v159
    %v161 = vrot.slane %v156, %v160
    %vm163 = vcmask 523264
    %v165 = vsel %vm163, %v146, 0
    %v168 = vsel %vm163, %v147, 0
    %170 = vmatprep.subr.mxu0 0.0
    %171 = vmatpush1.msra.mxu0 %v148
    %172 = vmatprep.subr.mxu0 0.0
    %173 = vmatpush1.msra.mxu0 %v149
    %174 = vmatprep.subr.mxu0 0.0
    %175 = vmatpush1.msra.mxu0 %v150
    %176 = vmatprep.subr.mxu0 0.0
    %177 = vmatpush1.msra.mxu0 %v151
    %178 = vmatprep.subr.mxu0 0.0
    %179 = vmatpush1.msra.mxu0 %v152
    %180 = vmatprep.subr.mxu0 0.0
    %181 = vmatpush1.msra.mxu0 %v153
    %182 = vmatprep.subr.mxu0 0.0
    %183 = vmatpush1.msra.mxu0 %v154
    %184 = vmatprep.subr.mxu0 0.0
    %185 = vmatpush1.msra.mxu0 %v155
    %186 = vmatprep.subr.mxu0 0.0
    %187 = vmatpush1.msra.mxu0 0.0
    %188 = vmatprep.subr.mxu0 0.0
    %189 = vmatpush1.msra.mxu0 0.0
    %190 = vmatprep.subr.mxu0 0.0
    %191 = vmatpush1.msra.mxu0 0.0
    %192 = vmatprep.subr.mxu0 0.0
    %193 = vmatpush1.msra.mxu0 0.0
    %194 = vmatprep.subr.mxu0 0.0
    %195 = vmatpush1.msra.mxu0 0.0
    %196 = vmatprep.subr.mxu0 0.0
    %197 = vmatpush1.msra.mxu0 0.0
    %198 = vmatprep.subr.mxu0 0.0
    %199 = vmatpush1.msra.mxu0 0.0
    %200 = vmatprep.subr.mxu0 0.0
    %201 = vmatpush1.msra.mxu0 0.0
    %202 = vmatprep.subr.mxu0 0.0
    %203 = vmatpush1.msra.mxu0 0.0
    %204 = vmatprep.subr.mxu0 0.0
    %205 = vmatpush1.msra.mxu0 0.0
    %206 = vmatprep.subr.mxu0 0.0
    %207 = vmatpush1.msra.mxu0 0.0
    %208 = vmatprep.subr.mxu0 0.0
    %209 = vmatpush1.msra.mxu0 0.0
    %210 = vmatprep.subr.mxu0 0.0
    %211 = vmatpush1.msra.mxu0 0.0
    %212 = vmatprep.subr.mxu0 0.0
    %213 = vmatpush1.msra.mxu0 0.0
    %214 = vmatprep.subr.mxu0 0.0
    %215 = vmatpush1.msra.mxu0 0.0
    %216 = vmatprep.subr.mxu0 0.0
    %217 = vmatpush1.msra.mxu0 0.0
    %218 = vmatprep.subr.mxu0 0.0
    %219 = vmatpush1.msra.mxu0 0.0
    %220 = vmatprep.subr.mxu0 0.0
    %221 = vmatpush1.msra.mxu0 0.0
    %222 = vmatprep.subr.mxu0 0.0
    %223 = vmatpush1.msra.mxu0 0.0
    %224 = vmatprep.subr.mxu0 0.0
    %225 = vmatpush1.msra.mxu0 0.0
    %226 = vmatprep.subr.mxu0 0.0
    %227 = vmatpush1.msra.mxu0 0.0
    %228 = vmatprep.subr.mxu0 0.0
    %229 = vmatpush1.msra.mxu0 0.0
    %230 = vmatprep.subr.mxu0 0.0
    %231 = vmatpush1.msra.mxu0 0.0
    %232 = vmatprep.subr.mxu0 0.0
    %233 = vmatpush1.msra.mxu0 0.0
    %234 = vmatprep.mubr.f32.mxu0 0.0
    %235 = vmatmul.mubr.f32.gmra.mrb[0].mxu0 %v165
    %v236 = vpop.f32.mrb[0].mxu0
    %v237 = vadd.f32 %v161, %v236
    %v238 = vpop.f32.mrb[0].mxu0
    %239 = vmatprep.mubr.f32.mxu0 0.0
    %240 = vmatmul.mubr.f32.gmra.mrb[0].mxu0 %v168
    %v241 = vpop.f32.mrb[0].mxu0
    %v242 = vadd.f32 %v161, %v241
    %v243 = vpop.f32.mrb[0].mxu0
    %244 = vdwg.mxu0
    %v245 = vld [vmem:[%s5] sm:$0xff]
    %v246 = vld [vmem:[%s5 + $0x8] sm:$0xff]
    %v247 = vld [vmem:[%s5 + $0x10] sm:$0xff]
    %v248 = vld [vmem:[%s5 + $0x18] sm:$0xff]
    %v249 = vld [vmem:[%s6] sm:$0x1]
    %v251 = vlaneseq
    %v252 = vshrl.u32 %v251, 7
    %v253 = vsub.s32 0, %v252
    %v254 = vrot.slane %v249, %v253
    %256 = vmatprep.subr.mxu0 0.0
    %257 = vmatpush1.msra.mxu0 %v245
    %258 = vmatprep.subr.mxu0 0.0
    %259 = vmatpush1.msra.mxu0 %v246
    %260 = vmatprep.subr.mxu0 0.0
    %261 = vmatpush1.msra.mxu0 %v247
    %262 = vmatprep.subr.mxu0 0.0
    %263 = vmatpush1.msra.mxu0 %v248
    %264 = vmatprep.subr.mxu0 0.0
    %265 = vmatpush1.msra.mxu0 0.0
    %266 = vmatprep.subr.mxu0 0.0
    %267 = vmatpush1.msra.mxu0 0.0
    %268 = vmatprep.subr.mxu0 0.0
    %269 = vmatpush1.msra.mxu0 0.0
    %270 = vmatprep.subr.mxu0 0.0
    %271 = vmatpush1.msra.mxu0 0.0
    %272 = vmatprep.subr.mxu0 0.0
    %273 = vmatpush1.msra.mxu0 0.0
    %274 = vmatprep.subr.mxu0 0.0
    %275 = vmatpush1.msra.mxu0 0.0
    %276 = vmatprep.subr.mxu0 0.0
    %277 = vmatpush1.msra.mxu0 0.0
    %278 = vmatprep.subr.mxu0 0.0
    %279 = vmatpush1.msra.mxu0 0.0
    %280 = vmatprep.subr.mxu0 0.0
    %281 = vmatpush1.msra.mxu0 0.0
    %282 = vmatprep.subr.mxu0 0.0
    %283 = vmatpush1.msra.mxu0 0.0
    %284 = vmatprep.subr.mxu0 0.0
    %285 = vmatpush1.msra.mxu0 0.0
    %286 = vmatprep.subr.mxu0 0.0
    %287 = vmatpush1.msra.mxu0 0.0
    %288 = vmatprep.subr.mxu0 0.0
    %289 = vmatpush1.msra.mxu0 0.0
    %290 = vmatprep.subr.mxu0 0.0
    %291 = vmatpush1.msra.mxu0 0.0
    %292 = vmatprep.subr.mxu0 0.0
    %293 = vmatpush1.msra.mxu0 0.0
    %294 = vmatprep.subr.mxu0 0.0
    %295 = vmatpush1.msra.mxu0 0.0
    %296 = vmatprep.subr.mxu0 0.0
    %297 = vmatpush1.msra.mxu0 0.0
    %298 = vmatprep.subr.mxu0 0.0
    %299 = vmatpush1.msra.mxu0 0.0
    %300 = vmatprep.subr.mxu0 0.0
    %301 = vmatpush1.msra.mxu0 0.0
    %302 = vmatprep.subr.mxu0 0.0
    %303 = vmatpush1.msra.mxu0 0.0
    %304 = vmatprep.subr.mxu0 0.0
    %305 = vmatpush1.msra.mxu0 0.0
    %306 = vmatprep.subr.mxu0 0.0
    %307 = vmatpush1.msra.mxu0 0.0
    %308 = vmatprep.subr.mxu0 0.0
    %309 = vmatpush1.msra.mxu0 0.0
    %310 = vmatprep.subr.mxu0 0.0
    %311 = vmatpush1.msra.mxu0 0.0
    %312 = vmatprep.subr.mxu0 0.0
    %313 = vmatpush1.msra.mxu0 0.0
    %314 = vmatprep.subr.mxu0 0.0
    %315 = vmatpush1.msra.mxu0 0.0
    %316 = vmatprep.subr.mxu0 0.0
    %317 = vmatpush1.msra.mxu0 0.0
    %318 = vmatprep.subr.mxu0 0.0
    %319 = vmatpush1.msra.mxu0 0.0
    %320 = vmatprep.mubr.f32.mxu0 0.0
    %321 = vmatmul.mubr.f32.gmra.mrb[0].mxu0 %v66
    %v322 = vpop.f32.mrb[0].mxu0
    %v323 = vadd.f32 %v254, %v322
    %v324 = vpop.f32.mrb[0].mxu0
    %325 = vmatprep.mubr.f32.mxu0 0.0
    %326 = vmatmul.mubr.f32.gmra.mrb[0].mxu0 %v69
    %v327 = vpop.f32.mrb[0].mxu0
    %v328 = vadd.f32 %v254, %v327
    %v329 = vpop.f32.mrb[0].mxu0
    %330 = vdwg.mxu0
    %331 = vmax.xlane.f32.xlu0 %v323
    %v332 = vpop.xlane.xlu0 %331
    %333 = vmax.xlane.f32.xlu0 %v328
    %v334 = vpop.xlane.xlu0 %333
    %v335 = vsub.f32 %v323, %v332
    %v336 = vsub.f32 %v328, %v334
    %v337 = vmul.f32 %v335, 1.442695
    %v338 = vpow.pop %v337
    %v339 = vmul.f32 %v336, 1.442695
    %v340 = vpow.pop %v339
    %341 = vadd.xlane.f32.xlu0 %v338
    %v342 = vpop.xlane.xlu0 %341
    %343 = vadd.xlane.f32.xlu0 %v340
    %v344 = vpop.xlane.xlu0 %343
    %v345 = vrcp.pop %v342
    %v346 = vrcp.pop %v344
    %v347 = vmul.f32 %v338, %v345
    %v348 = vmul.f32 %v340, %v346
    %v349 = vld [vmem:[%s7] sm:$0xff]
    %v350 = vld [vmem:[%s7 + $0x8] sm:$0xff]
    %v351 = vld [vmem:[%s7 + $0x10] sm:$0xff]
    %v352 = vld [vmem:[%s7 + $0x18] sm:$0xff]
    %v353 = vld [vmem:[%s7 + $0x20] sm:$0xff]
    %v354 = vld [vmem:[%s7 + $0x28] sm:$0xff]
    %v355 = vld [vmem:[%s7 + $0x30] sm:$0xff]
    %v356 = vld [vmem:[%s7 + $0x38] sm:$0xff]
    %v357 = vld [vmem:[%s8] sm:$0x3]
    %v359 = vlaneseq
    %v360 = vshrl.u32 %v359, 7
    %v361 = vsub.s32 0, %v360
    %v362 = vrot.slane %v357, %v361
    %v363 = vlaneseq
    %v364 = vshrl.u32 %v363, 7
    %v365 = vsub.s32 1, %v364
    %v366 = vrot.slane %v357, %v365
    %369 = vmatprep.subr.mxu0 %v350
    %370 = vmatpush1.msra.mxu0 %v349
    %371 = vmatprep.subr.mxu0 %v352
    %372 = vmatpush1.msra.mxu0 %v351
    %373 = vmatprep.subr.mxu0 %v354
    %374 = vmatpush1.msra.mxu0 %v353
    %375 = vmatprep.subr.mxu0 %v356
    %376 = vmatpush1.msra.mxu0 %v355
    %377 = vmatprep.subr.mxu0 0.0
    %378 = vmatpush1.msra.mxu0 0.0
    %379 = vmatprep.subr.mxu0 0.0
    %380 = vmatpush1.msra.mxu0 0.0
    %381 = vmatprep.subr.mxu0 0.0
    %382 = vmatpush1.msra.mxu0 0.0
    %383 = vmatprep.subr.mxu0 0.0
    %384 = vmatpush1.msra.mxu0 0.0
    %385 = vmatprep.subr.mxu0 0.0
    %386 = vmatpush1.msra.mxu0 0.0
    %387 = vmatprep.subr.mxu0 0.0
    %388 = vmatpush1.msra.mxu0 0.0
    %389 = vmatprep.subr.mxu0 0.0
    %390 = vmatpush1.msra.mxu0 0.0
    %391 = vmatprep.subr.mxu0 0.0
    %392 = vmatpush1.msra.mxu0 0.0
    %393 = vmatprep.subr.mxu0 0.0
    %394 = vmatpush1.msra.mxu0 0.0
    %395 = vmatprep.subr.mxu0 0.0
    %396 = vmatpush1.msra.mxu0 0.0
    %397 = vmatprep.subr.mxu0 0.0
    %398 = vmatpush1.msra.mxu0 0.0
    %399 = vmatprep.subr.mxu0 0.0
    %400 = vmatpush1.msra.mxu0 0.0
    %401 = vmatprep.subr.mxu0 0.0
    %402 = vmatpush1.msra.mxu0 0.0
    %403 = vmatprep.subr.mxu0 0.0
    %404 = vmatpush1.msra.mxu0 0.0
    %405 = vmatprep.subr.mxu0 0.0
    %406 = vmatpush1.msra.mxu0 0.0
    %407 = vmatprep.subr.mxu0 0.0
    %408 = vmatpush1.msra.mxu0 0.0
    %409 = vmatprep.subr.mxu0 0.0
    %410 = vmatpush1.msra.mxu0 0.0
    %411 = vmatprep.subr.mxu0 0.0
    %412 = vmatpush1.msra.mxu0 0.0
    %413 = vmatprep.subr.mxu0 0.0
    %414 = vmatpush1.msra.mxu0 0.0
    %415 = vmatprep.subr.mxu0 0.0
    %416 = vmatpush1.msra.mxu0 0.0
    %417 = vmatprep.subr.mxu0 0.0
    %418 = vmatpush1.msra.mxu0 0.0
    %419 = vmatprep.subr.mxu0 0.0
    %420 = vmatpush1.msra.mxu0 0.0
    %421 = vmatprep.subr.mxu0 0.0
    %422 = vmatpush1.msra.mxu0 0.0
    %423 = vmatprep.subr.mxu0 0.0
    %424 = vmatpush1.msra.mxu0 0.0
    %425 = vmatprep.subr.mxu0 0.0
    %426 = vmatpush1.msra.mxu0 0.0
    %427 = vmatprep.subr.mxu0 0.0
    %428 = vmatpush1.msra.mxu0 0.0
    %429 = vmatprep.subr.mxu0 0.0
    %430 = vmatpush1.msra.mxu0 0.0
    %431 = vmatprep.subr.mxu0 0.0
    %432 = vmatpush1.msra.mxu0 0.0
    %433 = vmatprep.mubr.f32.mxu0 0.0
    %434 = vmatmul.mubr.f32.gmra.mrb[0].mxu0 %v66
    %v435 = vpop.f32.mrb[0].mxu0
    %v436 = vadd.f32 %v362, %v435
    %v437 = vpop.f32.mrb[0].mxu0
    %v438 = vadd.f32 %v366, %v437
    %439 = vmatprep.mubr.f32.mxu0 0.0
    %440 = vmatmul.mubr.f32.gmra.mrb[0].mxu0 %v69
    %v441 = vpop.f32.mrb[0].mxu0
    %v442 = vadd.f32 %v362, %v441
    %v443 = vpop.f32.mrb[0].mxu0
    %v444 = vadd.f32 %v366, %v443
    %445 = vdwg.mxu0
    %v446 = vmax.f32 %v436, 0.0
    %v447 = vmax.f32 %v438, 0.0
    %v448 = vmax.f32 %v442, 0.0
    %v449 = vmax.f32 %v444, 0.0
    %v450 = vld [vmem:[%s11] sm:$0xff]
    %v451 = vld [vmem:[%s11 + $0x8] sm:$0xff]
    %v452 = vld [vmem:[%s11 + $0x10] sm:$0xff]
    %v453 = vld [vmem:[%s11 + $0x18] sm:$0xff]
    %v454 = vld [vmem:[%s11 + $0x20] sm:$0xff]
    %v455 = vld [vmem:[%s11 + $0x28] sm:$0xff]
    %v456 = vld [vmem:[%s11 + $0x30] sm:$0xff]
    %v457 = vld [vmem:[%s11 + $0x38] sm:$0xff]
    %v458 = vld [vmem:[%s11 + $0x40] sm:$0xff]
    %v459 = vld [vmem:[%s11 + $0x48] sm:$0xff]
    %v460 = vld [vmem:[%s11 + $0x50] sm:$0xff]
    %v461 = vld [vmem:[%s11 + $0x58] sm:$0xff]
    %v462 = vld [vmem:[%s11 + $0x60] sm:$0xff]
    %v463 = vld [vmem:[%s11 + $0x68] sm:$0xff]
    %v464 = vld [vmem:[%s11 + $0x70] sm:$0xff]
    %v465 = vld [vmem:[%s11 + $0x78] sm:$0xff]
    %v466 = vld [vmem:[%s11 + $0x80] sm:$0xff]
    %v467 = vld [vmem:[%s11 + $0x88] sm:$0xff]
    %v468 = vld [vmem:[%s11 + $0x90] sm:$0xff]
    %v469 = vld [vmem:[%s11 + $0x98] sm:$0xff]
    %v470 = vld [vmem:[%s11 + $0xa0] sm:$0xff]
    %v471 = vld [vmem:[%s11 + $0xa8] sm:$0xff]
    %v472 = vld [vmem:[%s11 + $0xb0] sm:$0xff]
    %v473 = vld [vmem:[%s11 + $0xb8] sm:$0xff]
    %v474 = vld [vmem:[%s11 + $0xc0] sm:$0xff]
    %v475 = vld [vmem:[%s11 + $0xc8] sm:$0xff]
    %v476 = vld [vmem:[%s11 + $0xd0] sm:$0xff]
    %v477 = vld [vmem:[%s11 + $0xd8] sm:$0xff]
    %v478 = vld [vmem:[%s11 + $0xe0] sm:$0xff]
    %v479 = vld [vmem:[%s11 + $0xe8] sm:$0xff]
    %v480 = vld [vmem:[%s11 + $0xf0] sm:$0xff]
    %v481 = vld [vmem:[%s11 + $0xf8] sm:$0xff]
    %482 = vmatprep.subr.mxu0 %v451
    %483 = vmatpush1.msra.mxu0 %v450
    %484 = vmatprep.subr.mxu0 %v453
    %485 = vmatpush1.msra.mxu0 %v452
    %486 = vmatprep.subr.mxu0 %v455
    %487 = vmatpush1.msra.mxu0 %v454
    %488 = vmatprep.subr.mxu0 %v457
    %489 = vmatpush1.msra.mxu0 %v456
    %490 = vmatprep.subr.mxu0 %v459
    %491 = vmatpush1.msra.mxu0 %v458
    %492 = vmatprep.subr.mxu0 %v461
    %493 = vmatpush1.msra.mxu0 %v460
    %494 = vmatprep.subr.mxu0 %v463
    %495 = vmatpush1.msra.mxu0 %v462
    %496 = vmatprep.subr.mxu0 %v465
    %497 = vmatpush1.msra.mxu0 %v464
    %498 = vmatprep.subr.mxu0 %v467
    %499 = vmatpush1.msra.mxu0 %v466
    %500 = vmatprep.subr.mxu0 %v469
    %501 = vmatpush1.msra.mxu0 %v468
    %502 = vmatprep.subr.mxu0 %v471
    %503 = vmatpush1.msra.mxu0 %v470
    %504 = vmatprep.subr.mxu0 %v473
    %505 = vmatpush1.msra.mxu0 %v472
    %506 = vmatprep.subr.mxu0 %v475
    %507 = vmatpush1.msra.mxu0 %v474
    %508 = vmatprep.subr.mxu0 %v477
    %509 = vmatpush1.msra.mxu0 %v476
    %510 = vmatprep.subr.mxu0 %v479
    %511 = vmatpush1.msra.mxu0 %v478
    %512 = vmatprep.subr.mxu0 %v481
    %513 = vmatpush1.msra.mxu0 %v480
    %514 = vmatprep.subr.mxu0 0.0
    %515 = vmatpush1.msra.mxu0 0.0
    %516 = vmatprep.subr.mxu0 0.0
    %517 = vmatpush1.msra.mxu0 0.0
    %518 = vmatprep.subr.mxu0 0.0
    %519 = vmatpush1.msra.mxu0 0.0
    %520 = vmatprep.subr.mxu0 0.0
    %521 = vmatpush1.msra.mxu0 0.0
    %522 = vmatprep.subr.mxu0 0.0
    %523 = vmatpush1.msra.mxu0 0.0
    %524 = vmatprep.subr.mxu0 0.0
    %525 = vmatpush1.msra.mxu0 0.0
    %526 = vmatprep.subr.mxu0 0.0
    %527 = vmatpush1.msra.mxu0 0.0
    %528 = vmatprep.subr.mxu0 0.0
    %529 = vmatpush1.msra.mxu0 0.0
    %530 = vmatprep.subr.mxu0 0.0
    %531 = vmatpush1.msra.mxu0 0.0
    %532 = vmatprep.subr.mxu0 0.0
    %533 = vmatpush1.msra.mxu0 0.0
    %534 = vmatprep.subr.mxu0 0.0
    %535 = vmatpush1.msra.mxu0 0.0
    %536 = vmatprep.subr.mxu0 0.0
    %537 = vmatpush1.msra.mxu0 0.0
    %538 = vmatprep.subr.mxu0 0.0
    %539 = vmatpush1.msra.mxu0 0.0
    %540 = vmatprep.subr.mxu0 0.0
    %541 = vmatpush1.msra.mxu0 0.0
    %542 = vmatprep.subr.mxu0 0.0
    %543 = vmatpush1.msra.mxu0 0.0
    %544 = vmatprep.subr.mxu0 0.0
    %545 = vmatpush1.msra.mxu0 0.0
    %546 = vmatprep.mubr.f32.mxu0 0.0
    %547 = vmatmul.mubr.f32.gmra.mrb[0].mxu0 %v347
    %v548 = vpop.f32.mrb[0].mxu0
    %v549 = vadd.f32 0.0, %v548
    %v550 = vpop.f32.mrb[0].mxu0
    %v551 = vadd.f32 0.0, %v550
    %552 = vmatprep.mubr.f32.mxu0 0.0
    %553 = vmatmul.mubr.f32.gmra.mrb[0].mxu0 %v348
    %v554 = vpop.f32.mrb[0].mxu0
    %v555 = vadd.f32 0.0, %v554
    %v556 = vpop.f32.mrb[0].mxu0
    %v557 = vadd.f32 0.0, %v556
    %558 = vdwg.mxu0
    %v559 = vmul.f32 %v446, %v549
    %v560 = vmul.f32 %v447, %v551
    %v561 = vmul.f32 %v448, %v555
    %v562 = vmul.f32 %v449, %v557
    %v563 = vld [vmem:[%s9] sm:$0xff]
    %v564 = vld [vmem:[%s9 + $0x8] sm:$0xff]
    %v565 = vld [vmem:[%s9 + $0x10] sm:$0xff]
    %v566 = vld [vmem:[%s9 + $0x18] sm:$0xff]
    %v567 = vld [vmem:[%s9 + $0x20] sm:$0xff]
    %v568 = vld [vmem:[%s9 + $0x28] sm:$0xff]
    %v569 = vld [vmem:[%s9 + $0x30] sm:$0xff]
    %v570 = vld [vmem:[%s9 + $0x38] sm:$0xff]
    %v571 = vld [vmem:[%s9 + $0x40] sm:$0xff]
    %v572 = vld [vmem:[%s9 + $0x48] sm:$0xff]
    %v573 = vld [vmem:[%s9 + $0x50] sm:$0xff]
    %v574 = vld [vmem:[%s9 + $0x58] sm:$0xff]
    %v575 = vld [vmem:[%s9 + $0x60] sm:$0xff]
    %v576 = vld [vmem:[%s9 + $0x68] sm:$0xff]
    %v577 = vld [vmem:[%s9 + $0x70] sm:$0xff]
    %v578 = vld [vmem:[%s9 + $0x78] sm:$0xff]
    %v579 = vld [vmem:[%s9 + $0x80] sm:$0xff]
    %v580 = vld [vmem:[%s9 + $0x88] sm:$0xff]
    %v581 = vld [vmem:[%s9 + $0x90] sm:$0xff]
    %v582 = vld [vmem:[%s9 + $0x98] sm:$0xff]
    %v583 = vld [vmem:[%s9 + $0xa0] sm:$0xff]
    %v584 = vld [vmem:[%s9 + $0xa8] sm:$0xff]
    %v585 = vld [vmem:[%s9 + $0xb0] sm:$0xff]
    %v586 = vld [vmem:[%s9 + $0xb8] sm:$0xff]
    %v587 = vld [vmem:[%s9 + $0xc0] sm:$0xff]
    %v588 = vld [vmem:[%s9 + $0xc8] sm:$0xff]
    %v589 = vld [vmem:[%s9 + $0xd0] sm:$0xff]
    %v590 = vld [vmem:[%s9 + $0xd8] sm:$0xff]
    %v591 = vld [vmem:[%s9 + $0xe0] sm:$0xff]
    %v592 = vld [vmem:[%s9 + $0xe8] sm:$0xff]
    %v593 = vld [vmem:[%s9 + $0xf0] sm:$0xff]
    %v594 = vld [vmem:[%s9 + $0xf8] sm:$0xff]
    %v595 = vld [vmem:[%s10] sm:$0xff]
    %v596 = vld [vmem:[%s10 + $0x8] sm:$0xff]
    %v597 = vld [vmem:[%s10 + $0x10] sm:$0xff]
    %v598 = vld [vmem:[%s10 + $0x18] sm:$0xff]
    %v599 = vld [vmem:[%s10 + $0x20] sm:$0xff]
    %v600 = vld [vmem:[%s10 + $0x28] sm:$0xff]
    %v601 = vld [vmem:[%s10 + $0x30] sm:$0xff]
    %v602 = vld [vmem:[%s10 + $0x38] sm:$0xff]
    %v603 = vld [vmem:[%s10 + $0x40] sm:$0xff]
    %v604 = vld [vmem:[%s10 + $0x48] sm:$0xff]
    %v605 = vld [vmem:[%s10 + $0x50] sm:$0xff]
    %v606 = vld [vmem:[%s10 + $0x58] sm:$0xff]
    %v607 = vld [vmem:[%s10 + $0x60] sm:$0xff]
    %v608 = vld [vmem:[%s10 + $0x68] sm:$0xff]
    %v609 = vld [vmem:[%s10 + $0x70] sm:$0xff]
    %v610 = vld [vmem:[%s10 + $0x78] sm:$0xff]
    %611 = vmatprep.subr.mxu0 0.0
    %612 = vmatpush1.msra.mxu0 %v595
    %613 = vmatprep.subr.mxu0 0.0
    %614 = vmatpush1.msra.mxu0 %v596
    %615 = vmatprep.subr.mxu0 0.0
    %616 = vmatpush1.msra.mxu0 %v597
    %617 = vmatprep.subr.mxu0 0.0
    %618 = vmatpush1.msra.mxu0 %v598
    %619 = vmatprep.subr.mxu0 0.0
    %620 = vmatpush1.msra.mxu0 %v599
    %621 = vmatprep.subr.mxu0 0.0
    %622 = vmatpush1.msra.mxu0 %v600
    %623 = vmatprep.subr.mxu0 0.0
    %624 = vmatpush1.msra.mxu0 %v601
    %625 = vmatprep.subr.mxu0 0.0
    %626 = vmatpush1.msra.mxu0 %v602
    %627 = vmatprep.subr.mxu0 0.0
    %628 = vmatpush1.msra.mxu0 %v603
    %629 = vmatprep.subr.mxu0 0.0
    %630 = vmatpush1.msra.mxu0 %v604
    %631 = vmatprep.subr.mxu0 0.0
    %632 = vmatpush1.msra.mxu0 %v605
    %633 = vmatprep.subr.mxu0 0.0
    %634 = vmatpush1.msra.mxu0 %v606
    %635 = vmatprep.subr.mxu0 0.0
    %636 = vmatpush1.msra.mxu0 %v607
    %637 = vmatprep.subr.mxu0 0.0
    %638 = vmatpush1.msra.mxu0 %v608
    %639 = vmatprep.subr.mxu0 0.0
    %640 = vmatpush1.msra.mxu0 %v609
    %641 = vmatprep.subr.mxu0 0.0
    %642 = vmatpush1.msra.mxu0 %v610
    %643 = vmatprep.subr.mxu0 0.0
    %644 = vmatpush1.msra.mxu0 0.0
    %645 = vmatprep.subr.mxu0 0.0
    %646 = vmatpush1.msra.mxu0 0.0
    %647 = vmatprep.subr.mxu0 0.0
    %648 = vmatpush1.msra.mxu0 0.0
    %649 = vmatprep.subr.mxu0 0.0
    %650 = vmatpush1.msra.mxu0 0.0
    %651 = vmatprep.subr.mxu0 0.0
    %652 = vmatpush1.msra.mxu0 0.0
    %653 = vmatprep.subr.mxu0 0.0
    %654 = vmatpush1.msra.mxu0 0.0
    %655 = vmatprep.subr.mxu0 0.0
    %656 = vmatpush1.msra.mxu0 0.0
    %657 = vmatprep.subr.mxu0 0.0
    %658 = vmatpush1.msra.mxu0 0.0
    %659 = vmatprep.subr.mxu0 0.0
    %660 = vmatpush1.msra.mxu0 0.0
    %661 = vmatprep.subr.mxu0 0.0
    %662 = vmatpush1.msra.mxu0 0.0
    %663 = vmatprep.subr.mxu0 0.0
    %664 = vmatpush1.msra.mxu0 0.0
    %665 = vmatprep.subr.mxu0 0.0
    %666 = vmatpush1.msra.mxu0 0.0
    %667 = vmatprep.subr.mxu0 0.0
    %668 = vmatpush1.msra.mxu0 0.0
    %669 = vmatprep.subr.mxu0 0.0
    %670 = vmatpush1.msra.mxu0 0.0
    %671 = vmatprep.subr.mxu0 0.0
    %672 = vmatpush1.msra.mxu0 0.0
    %673 = vmatprep.subr.mxu0 0.0
    %674 = vmatpush1.msra.mxu0 0.0
    %675 = vmatprep.mubr.f32.mxu0 0.0
    %676 = vmatmul.mubr.f32.gmra.mrb[0].mxu0 %v347
    %v677 = vpop.f32.mrb[0].mxu0
    %v678 = vadd.f32 0.0, %v677
    %v679 = vpop.f32.mrb[0].mxu0
    %680 = vmatprep.mubr.f32.mxu0 0.0
    %681 = vmatmul.mubr.f32.gmra.mrb[0].mxu0 %v348
    %v682 = vpop.f32.mrb[0].mxu0
    %v683 = vadd.f32 0.0, %v682
    %v684 = vpop.f32.mrb[0].mxu0
    %685 = vdwg.mxu0
    %686 = vmatprep.subr.mxu0 0.0
    %687 = vmatpush1.msra.mxu0 %v563
    %688 = vmatprep.subr.mxu0 0.0
    %689 = vmatpush1.msra.mxu0 %v564
    %690 = vmatprep.subr.mxu0 0.0
    %691 = vmatpush1.msra.mxu0 %v565
    %692 = vmatprep.subr.mxu0 0.0
    %693 = vmatpush1.msra.mxu0 %v566
    %694 = vmatprep.subr.mxu0 0.0
    %695 = vmatpush1.msra.mxu0 %v567
    %696 = vmatprep.subr.mxu0 0.0
    %697 = vmatpush1.msra.mxu0 %v568
    %698 = vmatprep.subr.mxu0 0.0
    %699 = vmatpush1.msra.mxu0 %v569
    %700 = vmatprep.subr.mxu0 0.0
    %701 = vmatpush1.msra.mxu0 %v570
    %702 = vmatprep.subr.mxu0 0.0
    %703 = vmatpush1.msra.mxu0 %v571
    %704 = vmatprep.subr.mxu0 0.0
    %705 = vmatpush1.msra.mxu0 %v572
    %706 = vmatprep.subr.mxu0 0.0
    %707 = vmatpush1.msra.mxu0 %v573
    %708 = vmatprep.subr.mxu0 0.0
    %709 = vmatpush1.msra.mxu0 %v574
    %710 = vmatprep.subr.mxu0 0.0
    %711 = vmatpush1.msra.mxu0 %v575
    %712 = vmatprep.subr.mxu0 0.0
    %713 = vmatpush1.msra.mxu0 %v576
    %714 = vmatprep.subr.mxu0 0.0
    %715 = vmatpush1.msra.mxu0 %v577
    %716 = vmatprep.subr.mxu0 0.0
    %717 = vmatpush1.msra.mxu0 %v578
    %718 = vmatprep.subr.mxu0 0.0
    %719 = vmatpush1.msra.mxu0 %v579
    %720 = vmatprep.subr.mxu0 0.0
    %721 = vmatpush1.msra.mxu0 %v580
    %722 = vmatprep.subr.mxu0 0.0
    %723 = vmatpush1.msra.mxu0 %v581
    %724 = vmatprep.subr.mxu0 0.0
    %725 = vmatpush1.msra.mxu0 %v582
    %726 = vmatprep.subr.mxu0 0.0
    %727 = vmatpush1.msra.mxu0 %v583
    %728 = vmatprep.subr.mxu0 0.0
    %729 = vmatpush1.msra.mxu0 %v584
    %730 = vmatprep.subr.mxu0 0.0
    %731 = vmatpush1.msra.mxu0 %v585
    %732 = vmatprep.subr.mxu0 0.0
    %733 = vmatpush1.msra.mxu0 %v586
    %734 = vmatprep.subr.mxu0 0.0
    %735 = vmatpush1.msra.mxu0 %v587
    %736 = vmatprep.subr.mxu0 0.0
    %737 = vmatpush1.msra.mxu0 %v588
    %738 = vmatprep.subr.mxu0 0.0
    %739 = vmatpush1.msra.mxu0 %v589
    %740 = vmatprep.subr.mxu0 0.0
    %741 = vmatpush1.msra.mxu0 %v590
    %742 = vmatprep.subr.mxu0 0.0
    %743 = vmatpush1.msra.mxu0 %v591
    %744 = vmatprep.subr.mxu0 0.0
    %745 = vmatpush1.msra.mxu0 %v592
    %746 = vmatprep.subr.mxu0 0.0
    %747 = vmatpush1.msra.mxu0 %v593
    %748 = vmatprep.subr.mxu0 0.0
    %749 = vmatpush1.msra.mxu0 %v594
    %750 = vmatprep.mubr.f32.mxu0 %v560
    %751 = vmatmul.mubr.f32.gmra.mrb[0].mxu0 %v559
    %v752 = vpop.f32.mrb[0].mxu0
    %v753 = vadd.f32 %v678, %v752
    %v754 = vpop.f32.mrb[0].mxu0
    %755 = vmatprep.mubr.f32.mxu0 %v562
    %756 = vmatmul.mubr.f32.gmra.mrb[0].mxu0 %v561
    %v757 = vpop.f32.mrb[0].mxu0
    %v758 = vadd.f32 %v683, %v757
    %v759 = vpop.f32.mrb[0].mxu0
    %760 = vdwg.mxu0
    %v761 = vmul.f32 %v237, 0.6
    %v762 = vmul.f32 %v242, 0.6
    %v763 = vmul.f32 %v753, 0.4
    %v764 = vmul.f32 %v758, 0.4
    %v765 = vadd.f32 %v761, %v763
    %v766 = vadd.f32 %v762, %v764
    %v767 = vadd.f32 %v765, %v51
    %v768 = vadd.f32 %v766, %v52
    %v769 = vsel %vm64, %v767, 0.0
    %770 = vadd.xlane.f32.xlu0 %v769
    %v771 = vpop.xlane.xlu0 %770
    %v772 = vsel %vm64, %v768, 0.0
    %773 = vadd.xlane.f32.xlu0 %v772
    %v774 = vpop.xlane.xlu0 %773
    %v775 = vrcp.pop 32.0
    %v776 = vmul.f32 %v771, %v775
    %v777 = vmul.f32 %v774, %v775
    %v778 = vsub.f32 %v767, %v776
    %v779 = vsub.f32 %v768, %v777
    %v780 = vmul.f32 %v778, %v778
    %v781 = vmul.f32 %v779, %v779
    %v782 = vsel %vm64, %v780, 0.0
    %783 = vadd.xlane.f32.xlu0 %v782
    %v784 = vpop.xlane.xlu0 %783
    %v785 = vsel %vm64, %v781, 0.0
    %786 = vadd.xlane.f32.xlu0 %v785
    %v787 = vpop.xlane.xlu0 %786
    %v788 = vmul.f32 %v784, %v775
    %v789 = vmul.f32 %v787, %v775
    %v790 = vadd.f32 %v788, 1e-05
    %v791 = vadd.f32 %v789, 1e-05
    %v792 = vrsqrt.pop %v790
    %v793 = vrsqrt.pop %v791
    %v794 = vmul.f32 %v778, %v792
    %v795 = vmul.f32 %v779, %v793
    %v796 = vld [vmem:[%s12] sm:$0x1]
    %v798 = vlaneseq
    %v799 = vshrl.u32 %v798, 7
    %v800 = vsub.s32 0, %v799
    %v801 = vrot.slane %v796, %v800
    %v803 = vmul.f32 %v794, %v801
    %v804 = vmul.f32 %v795, %v801
    %v805 = vld [vmem:[%s13] sm:$0x1]
    %v807 = vlaneseq
    %v808 = vshrl.u32 %v807, 7
    %v809 = vsub.s32 0, %v808
    %v810 = vrot.slane %v805, %v809
    %v812 = vadd.f32 %v803, %v810
    %v813 = vadd.f32 %v804, %v810
    %814 = vst.msk [vmem:[#allocation2] sm:$0xff] %vm64, %v812
    %815 = vst.msk [vmem:[#allocation2 + $0x8] sm:$0xff] %vm64, %v813
    %s816 = smul.u32 0, 16
    %v817 = vlaneseq
    %v818 = vshrl.u32 %v817, 7
    %v819 = vadd.s32 %v818, 8
    %v820 = vstv %s816
    %v821 = vadd.s32 %v820, %v818
    %v822 = vadd.s32 %v820, %v819
    %vm823 = vcmp.lt.s32.totalorder %v821, 16
    %vm824 = vcmp.lt.s32.totalorder %v822, 16
    %v825 = vlaneseq
    %v826 = vand.u32 %v825, 127
    %vm827 = vcmp.ge.f32.partialorder %v323, %v332
    %vm828 = vcmp.ge.f32.partialorder %v328, %v334
    %v829 = vsel %vm827, %v826, 128
    %v830 = vsel %vm828, %v826, 128
    %v831 = vand.u32 %v829, 65535
    %v832 = vshra.s32 %v829, 16
    %v833 = vcvt.s32.f32 %v831
    %v834 = vcvt.s32.f32 %v832
    %835 = vmin.xlane.f32.xlu0 %v834
    %v836 = vpop.xlane.xlu0 %835
    %vm837 = vcmp.eq.f32.partialorder %v834, %v836
    %v838 = vsel %vm837, %v833, inf
    %839 = vmin.xlane.f32.xlu0 %v838
    %v840 = vpop.xlane.xlu0 %839
    %v841 = vcvt.f32.s32 %v840
    %v842 = vcvt.f32.s32 %v836
    %v843 = vshll.u32 %v842, 16
    %v844 = vadd.s32 %v843, %v841
    %v845 = vand.u32 %v830, 65535
    %v846 = vshra.s32 %v830, 16
    %v847 = vcvt.s32.f32 %v845
    %v848 = vcvt.s32.f32 %v846
    %849 = vmin.xlane.f32.xlu0 %v848
    %v850 = vpop.xlane.xlu0 %849
    %vm851 = vcmp.eq.f32.partialorder %v848, %v850
    %v852 = vsel %vm851, %v847, inf
    %853 = vmin.xlane.f32.xlu0 %v852
    %v854 = vpop.xlane.xlu0 %853
    %v855 = vcvt.f32.s32 %v854
    %v856 = vcvt.f32.s32 %v850
    %v857 = vshll.u32 %v856, 16
    %v858 = vadd.s32 %v857, %v855
    %vm859 = vcmp.eq.s32.totalorder %v826, %v844
    %vm860 = vcmp.eq.s32.totalorder %v826, %v858
    %v861 = vsel %vm859, 1, 0
    %v862 = vsel %vm860, 1, 0
    %v863 = vcvt.s32.f32 %v861
    %v864 = vcvt.s32.f32 %v862
    %v865 = vsel %vm823, 1, 0
    %v866 = vsel %vm824, 1, 0
    %vm867 = vcmp.eq.s32.totalorder %v865, 1
    %vm868 = vcmp.eq.s32.totalorder %v866, 1
    %v869 = vsel %vm867, %v347, 0.0
    %v870 = vsel %vm868, %v348, 0.0
    %v871 = vsel %vm867, %v863, 0.0
    %v872 = vsel %vm868, %v864, 0.0
    %v873 = vadd.f32 %v869, %v870
    %v874 = vrot.slane %v873, 4
    %v875 = vadd.f32 %v873, %v874
    %v876 = vrot.slane %v875, 2
    %v877 = vadd.f32 %v875, %v876
    %v878 = vrot.slane %v877, 1
    %v879 = vadd.f32 %v877, %v878
    %880 = vst [vmem:[#allocation4] sm:$0x1] %v879
    %v881 = vadd.f32 %v871, %v872
    %v882 = vrot.slane %v881, 4
    %v883 = vadd.f32 %v881, %v882
    %v884 = vrot.slane %v883, 2
    %v885 = vadd.f32 %v883, %v884
    %v886 = vrot.slane %v885, 1
    %v887 = vadd.f32 %v885, %v886
    %888 = vst [vmem:[#allocation4 + $0x1] sm:$0x1] %v887
    // Predicated region
    $region58: #{tpu_custom_call.1} parent=1 // pred_check
      _
    $region59: #{tpu_custom_call.1} parent=1 // pred_check_branch
      %890 = sbr.rel (0) target = $region61
    $region60: #{tpu_custom_call.1} parent=1 // pred_region
      %s892 = ssub.s32 256, 256
      %893 = vsyncadd [#allocation3], %s892
      %s894 = sshll.u32 [#allocation2], 4
      %s895 = int_to_ptr.vmem [resolvable:$true] %s894
      %900 = dma.vmem_to_hbm [thread:$0]  %s895, 256, %s14, [#allocation3], 128, 128, 8
    $region61: #{tpu_custom_call.1} parent=1 // pred_fallthru
      _
    // Predicated region
    $region62: #{tpu_custom_call.1} parent=1 // pred_check
      _
    $region63: #{tpu_custom_call.1} parent=1 // pred_check_branch
      %902 = sbr.rel (0) target = $region65
    $region64: #{tpu_custom_call.1} parent=1 // pred_region
      %s904 = ssub.s32 32, 32
      %905 = vsyncadd [#allocation5], %s904
      %s907 = sshll.u32 [#allocation4], 4
      %s908 = int_to_ptr.vmem [resolvable:$true] %s907
      %910 = dma.vmem_to_hbm [thread:$0]  %s908, 32, %s15, [#allocation5]
    $region65: #{tpu_custom_call.1} parent=1 // pred_fallthru
      _
    // Predicated region
    $region66: #{tpu_custom_call.1} parent=1 // pred_check
      _
    $region67: #{tpu_custom_call.1} parent=1 // pred_check_branch
      %912 = sbr.rel (0) target = $region69
    $region68: #{tpu_custom_call.1} parent=1 // pred_region
      %913 = dma.done [#allocation3], 256
    $region69: #{tpu_custom_call.1} parent=1 // pred_fallthru
      _
    // Predicated region
    $region70: #{tpu_custom_call.1} parent=1 // pred_check
      _
    $region71: #{tpu_custom_call.1} parent=1 // pred_check_branch
      %915 = sbr.rel (0) target = $region73
    $region72: #{tpu_custom_call.1} parent=1 // pred_region
      %916 = dma.done [#allocation5], 32
    $region73: #{tpu_custom_call.1} parent=1 // pred_fallthru
      _
    %917 = vsyncpa [#allocation3], 1
    %918 = vsyncpa [#allocation5], 1

</llo_original>
